<compile_context>
chip_gen: v6e
topology: v6e:2x2x1
jax: 0.10.0
libtpu: 0.0.40
codegen_flags: <defaults>
</compile_context>

<pallas_src>
import functools

import jax
import jax.numpy as jnp
from jax.experimental import pallas as pl
from jax.experimental.pallas import tpu as pltpu

LANE = 128                       # vreg lane width
CHUNK = 32                       # sublane rows per in-kernel strip
TARGET_BLOCK_BYTES = 4 << 20     # per-step logits block target


def _ce_sum_kernel(logits_ref, tgt_ref, out_ref, acc_ref, *,
                   num_classes, ts, ch, num_chunks, hw_valid,
                   tiles_per_split, first_masked_tile, needs_mask):
    """One (batch, split, pixel-tile) grid step: accumulate
       sum( logsumexp(logits) - logits[target] ) over the tile's pixels into a
       per-lane (ch, 128) f32 accumulator; one cross-lane reduce at the last
       tile of the split."""
    s = pl.program_id(1)
    j = pl.program_id(2)

    @pl.when(j == 0)
    def _():
        acc_ref[...] = jnp.zeros_like(acc_ref)

    tile_t = s * tiles_per_split + j  # global pixel-row-tile index (may overshoot)

    def accumulate(masked):
        # Strip-mined class reduction: per chunk the live set is ~5 vregs
        # (m, ssum, tlog, tgt, row) independent of C and TS.
        def chunk(i, carry):
            start = pl.multiple_of(i * ch, ch)
            tgt = tgt_ref[0, pl.ds(start, ch), :]                      # (ch, 128) i32
            # pass 1: running max over classes (rows re-read from VMEM, cheap)
            m = logits_ref[0, 0, pl.ds(start, ch), :].astype(jnp.float32)
            for c in range(1, num_classes):
                m = jnp.maximum(
                    m, logits_ref[0, c, pl.ds(start, ch), :].astype(jnp.float32))
            # pass 2: exp-sum + target-logit gather via select (no XLU gather)
            ssum = jnp.zeros_like(m)
            tlog = jnp.zeros_like(m)
            for c in range(num_classes):
                row = logits_ref[0, c, pl.ds(start, ch), :].astype(jnp.float32)
                ssum = ssum + jnp.exp(row - m)
                tlog = jnp.where(tgt == c, row, tlog)
            loss = (m + jnp.log(ssum)) - tlog                          # (ch, 128)
            if masked:
                # Only compiled into the tail path; select (not multiply) so
                # undefined data in partial edge blocks never leaks.
                sub = jax.lax.broadcasted_iota(jnp.int32, (ch, LANE), 0)
                lane = jax.lax.broadcasted_iota(jnp.int32, (ch, LANE), 1)
                pix = (tile_t * ts + start + sub) * LANE + lane
                loss = jnp.where(pix < hw_valid, loss, 0.0)
            acc_ref[...] += loss
            return carry

        jax.lax.fori_loop(0, num_chunks, chunk, 0)

    if needs_mask:
        # Interior tiles never pay the iota/compare/select.
        @pl.when(tile_t < first_masked_tile)
        def _():
            accumulate(False)

        @pl.when(tile_t >= first_masked_tile)
        def _():
            accumulate(True)
    else:
        accumulate(False)

    @pl.when(j == pl.num_programs(2) - 1)
    def _():
        out_ref[...] = jnp.sum(acc_ref[...]).reshape(1, 1, 1)


@jax.jit
def cross_entropy_loss(preds, target):
    """Mean softmax cross-entropy. preds: [N, C, H, W] float, target: [N, H, W] int."""
    n, c, h, w = preds.shape
    hw = h * w
    itemsize = jnp.dtype(preds.dtype).itemsize

    # Free reshape of NCHW -> [N, C, HW//128, 128]: class axis stays leading,
    # pixel axis is split sublane x lane -> dense vregs, no HBM transpose.
    hw_pad = ((hw + LANE - 1) // LANE) * LANE
    logits = preds.reshape(n, c, hw)
    tgt = target.reshape(n, hw).astype(jnp.int32)
    if hw_pad != hw:
        # TODO(synk): ragged HW pays one pad copy; a fully zero-copy path would
        # block the flat [N, C, HW] layout and mask the tail in-kernel.
        logits = jnp.pad(logits, ((0, 0), (0, 0), (0, hw_pad - hw)))
        tgt = jnp.pad(tgt, ((0, 0), (0, hw_pad - hw)))
    hp = hw_pad // LANE
    logits = logits.reshape(n, c, hp, LANE)
    tgt = tgt.reshape(n, hp, LANE)

    # --- tiling -------------------------------------------------------------
    # Aim for ~TARGET_BLOCK_BYTES of logits per grid step, capped at ~half the
    # image so every image yields >= 2 pixel tiles (keeps both v7x TensorCores
    # busy even at batch 1 via the 2-way parallel split below).
    bytes_per_row = c * LANE * itemsize
    ts_target = max(CHUNK, (TARGET_BLOCK_BYTES // bytes_per_row) // CHUNK * CHUNK)
    if hp <= CHUNK:
        ts, ch = hp, hp
    else:
        half = max(CHUNK, ((hp // 2) // CHUNK) * CHUNK)
        ts = max(CHUNK, min(ts_target, half))
        ch = CHUNK
    num_chunks = ts // ch
    num_tiles = -(-hp // ts)                      # cdiv
    split = 2 if num_tiles >= 2 else 1
    tiles_per_split = -(-num_tiles // split)      # cdiv

    total_cover = split * tiles_per_split * ts * LANE
    needs_mask = total_cover != hw
    first_masked_tile = hw // (ts * LANE)

    kernel = functools.partial(
        _ce_sum_kernel, num_classes=c, ts=ts, ch=ch, num_chunks=num_chunks,
        hw_valid=hw, tiles_per_split=tiles_per_split,
        first_masked_tile=first_masked_tile, needs_mask=needs_mask)

    nt = num_tiles  # clamp in the index maps so DMAs never start fully OOB

    def logits_map(b, s, j):
        return (b, 0, jnp.minimum(s * tiles_per_split + j, nt - 1), 0)

    def tgt_map(b, s, j):
        return (b, jnp.minimum(s * tiles_per_split + j, nt - 1), 0)

    # Right-size scoped VMEM: 2x double-buffered logits + 2x target + acc + margin.
    logits_block_bytes = c * ts * LANE * itemsize
    tgt_block_bytes = ts * LANE * 4
    vmem_need = 2 * logits_block_bytes + 2 * tgt_block_bytes + ch * LANE * 4 + (2 << 20)
    vmem_limit = int(min(max(vmem_need, 1 << 20), 64 << 20))

    cost = pl.CostEstimate(
        flops=int(n * hw * (5 * c + 5)),
        transcendentals=int(n * hw * (c + 1)),
        bytes_accessed=int(n * c * hw * itemsize + n * hw * 4 + n * split * 4))

    partial_sums = pl.pallas_call(
        kernel,
        out_shape=jax.ShapeDtypeStruct((n, split, 1), jnp.float32),
        grid_spec=pltpu.PrefetchScalarGridSpec(
            num_scalar_prefetch=0,
            grid=(n, split, tiles_per_split),
            in_specs=[
                pl.BlockSpec((1, c, ts, LANE), logits_map),
                pl.BlockSpec((1, ts, LANE), tgt_map),
            ],
            out_specs=pl.BlockSpec((1, 1, 1), lambda b, s, j: (b, s, 0)),
            scratch_shapes=[pltpu.VMEM((ch, LANE), jnp.float32)],
        ),
        compiler_params=pltpu.CompilerParams(
            dimension_semantics=("parallel", "parallel", "arbitrary"),
            vmem_limit_bytes=vmem_limit,
        ),
        cost_estimate=cost,
    )(logits, tgt)

    # Per-(image, split) partial sums -> global mean over all true pixels.
    return jnp.sum(partial_sums) / jnp.float32(n * hw)


class MyLossPallas:
    """JAX/Pallas equivalent of myLoss with loss_name=['CELoss'], loss_weight=[1.0]."""

    def __init__(self, loss_weight=(1.0,)):
        self.loss_weight = loss_weight
        self.losses = [cross_entropy_loss]  # default: a single CELoss

    def __call__(self, preds, target):
        loss = jnp.float32(0.0)
        for fn, wgt in zip(self.losses, self.loss_weight):
            loss = loss + fn(preds, target) * jnp.float32(wgt)
        return loss


if __name__ == "__main__":
    key = jax.random.PRNGKey(0)
    k1, k2 = jax.random.split(key)

    # small segmentation-style shapes: batch=2, classes=4, spatial=16x16
    N, C, H, W = 2, 4, 16, 16
    preds = jax.random.normal(k1, (N, C, H, W), dtype=jnp.float32)
    target = jax.random.randint(k2, (N, H, W), 0, C, dtype=jnp.int32)

    loss_mod = MyLossPallas(loss_weight=(1.0,))
    loss = loss_mod(preds, target)
    jax.block_until_ready(loss)

    # sanity check against pure-JAX reference
    logits_ref = jnp.transpose(preds, (0, 2, 3, 1)).reshape(-1, C)
    tgt_ref = target.reshape(-1)
    ref = jnp.mean(
        jax.nn.logsumexp(logits_ref, axis=-1)
        - jnp.take_along_axis(logits_ref, tgt_ref[:, None], axis=-1)[:, 0])
    assert jnp.allclose(loss, ref, rtol=1e-5, atol=1e-5), (loss, ref)

    print("KERNEL_OK")
</pallas_src>

<mosaic_0001>
module attributes {stable_mosaic.version = 11 : i64} {
  func.func @_ce_sum_kernel(%arg0: i32, %arg1: i32, %arg2: i32, %arg3: memref<1x4x2x128xf32, #tpu.memory_space<vmem>>, %arg4: memref<1x2x128xi32, #tpu.memory_space<vmem>>, %arg5: memref<1x1x1xf32, #tpu.memory_space<vmem>>, %arg6: memref<2x128xf32, #tpu.memory_space<vmem>>) attributes {dimension_semantics = [#tpu.dimension_semantics<parallel>, #tpu.dimension_semantics<parallel>, #tpu.dimension_semantics<arbitrary>], iteration_bounds = array<i64: 2, 1, 1>, scalar_prefetch = 0 : i64, scratch_operands = 1 : i64, tpu.core_type = #tpu.core_type<tc>, window_params = [{transform_indices = @transform_0, window_bounds = array<i64: 1, 4, 2, 128>}, {transform_indices = @transform_1, window_bounds = array<i64: 1, 2, 128>}, {transform_indices = @transform_2, window_bounds = array<i64: 1, 1, 1>}]} {
    %c0_i32 = arith.constant 0 : i32
    %0 = arith.cmpi eq, %arg2, %c0_i32 : i32
    %1 = arith.extui %0 : i1 to i32
    %c0_i32_0 = arith.constant 0 : i32
    %2 = arith.cmpi ne, %1, %c0_i32_0 : i32
    scf.if %2 {
      %cst_34 = arith.constant 0.000000e+00 : f32
      %70 = vector.broadcast %cst_34 : f32 to vector<2x128xf32>
      %c0_35 = arith.constant 0 : index
      %c0_36 = arith.constant 0 : index
      %71 = vector.load %arg6[%c0_35, %c0_36] : memref<2x128xf32, #tpu.memory_space<vmem>>, vector<2x128xf32>
      tpu.vector_store %arg6[%c0_35, %c0_36], %70 {strides = array<i32>} : memref<2x128xf32, #tpu.memory_space<vmem>>, vector<2x128xf32>,
    } else {
    }
    %c0_i32_1 = arith.constant 0 : i32
    %c2_i32 = arith.constant 2 : i32
    %3 = arith.muli %c0_i32_1, %c2_i32 : i32
    %4 = tpu.assume_multiple %3, 2 : i32
    %c0 = arith.constant 0 : index
    %5 = arith.index_cast %4 : i32 to index
    %c0_2 = arith.constant 0 : index
    %6 = vector.load %arg4[%c0, %5, %c0_2] : memref<1x2x128xi32, #tpu.memory_space<vmem>>, vector<1x2x128xi32>
    %7 = vector.shape_cast %6 : vector<1x2x128xi32> to vector<2x128xi32>
    %c0_3 = arith.constant 0 : index
    %c0_4 = arith.constant 0 : index
    %8 = arith.index_cast %4 : i32 to index
    %c0_5 = arith.constant 0 : index
    %9 = vector.load %arg3[%c0_3, %c0_4, %8, %c0_5] : memref<1x4x2x128xf32, #tpu.memory_space<vmem>>, vector<1x1x2x128xf32>
    %10 = vector.shape_cast %9 : vector<1x1x2x128xf32> to vector<2x128xf32>
    %c0_6 = arith.constant 0 : index
    %c1 = arith.constant 1 : index
    %11 = arith.index_cast %4 : i32 to index
    %c0_7 = arith.constant 0 : index
    %12 = vector.load %arg3[%c0_6, %c1, %11, %c0_7] : memref<1x4x2x128xf32, #tpu.memory_space<vmem>>, vector<1x1x2x128xf32>
    %13 = vector.shape_cast %12 : vector<1x1x2x128xf32> to vector<2x128xf32>
    %14 = arith.maximumf %10, %13 : vector<2x128xf32>
    %c0_8 = arith.constant 0 : index
    %c2 = arith.constant 2 : index
    %15 = arith.index_cast %4 : i32 to index
    %c0_9 = arith.constant 0 : index
    %16 = vector.load %arg3[%c0_8, %c2, %15, %c0_9] : memref<1x4x2x128xf32, #tpu.memory_space<vmem>>, vector<1x1x2x128xf32>
    %17 = vector.shape_cast %16 : vector<1x1x2x128xf32> to vector<2x128xf32>
    %18 = arith.maximumf %14, %17 : vector<2x128xf32>
    %c0_10 = arith.constant 0 : index
    %c3 = arith.constant 3 : index
    %19 = arith.index_cast %4 : i32 to index
    %c0_11 = arith.constant 0 : index
    %20 = vector.load %arg3[%c0_10, %c3, %19, %c0_11] : memref<1x4x2x128xf32, #tpu.memory_space<vmem>>, vector<1x1x2x128xf32>
    %21 = vector.shape_cast %20 : vector<1x1x2x128xf32> to vector<2x128xf32>
    %22 = arith.maximumf %18, %21 : vector<2x128xf32>
    %cst = arith.constant 0.000000e+00 : f32
    %23 = vector.broadcast %cst : f32 to vector<2x128xf32>
    %cst_12 = arith.constant 0.000000e+00 : f32
    %24 = vector.broadcast %cst_12 : f32 to vector<2x128xf32>
    %c0_13 = arith.constant 0 : index
    %c0_14 = arith.constant 0 : index
    %25 = arith.index_cast %4 : i32 to index
    %c0_15 = arith.constant 0 : index
    %26 = vector.load %arg3[%c0_13, %c0_14, %25, %c0_15] : memref<1x4x2x128xf32, #tpu.memory_space<vmem>>, vector<1x1x2x128xf32>
    %27 = vector.shape_cast %26 : vector<1x1x2x128xf32> to vector<2x128xf32>
    %28 = arith.subf %27, %22 : vector<2x128xf32>
    %29 = math.exp %28 : vector<2x128xf32>
    %30 = arith.addf %23, %29 : vector<2x128xf32>
    %c0_i32_16 = arith.constant 0 : i32
    %31 = vector.broadcast %c0_i32_16 : i32 to vector<2x128xi32>
    %32 = arith.cmpi eq, %7, %31 : vector<2x128xi32>
    %33 = arith.select %32, %27, %24 : vector<2x128xi1>, vector<2x128xf32>
    %c0_17 = arith.constant 0 : index
    %c1_18 = arith.constant 1 : index
    %34 = arith.index_cast %4 : i32 to index
    %c0_19 = arith.constant 0 : index
    %35 = vector.load %arg3[%c0_17, %c1_18, %34, %c0_19] : memref<1x4x2x128xf32, #tpu.memory_space<vmem>>, vector<1x1x2x128xf32>
    %36 = vector.shape_cast %35 : vector<1x1x2x128xf32> to vector<2x128xf32>
    %37 = arith.subf %36, %22 : vector<2x128xf32>
    %38 = math.exp %37 : vector<2x128xf32>
    %39 = arith.addf %30, %38 : vector<2x128xf32>
    %c1_i32 = arith.constant 1 : i32
    %40 = vector.broadcast %c1_i32 : i32 to vector<2x128xi32>
    %41 = arith.cmpi eq, %7, %40 : vector<2x128xi32>
    %42 = arith.select %41, %36, %33 : vector<2x128xi1>, vector<2x128xf32>
    %c0_20 = arith.constant 0 : index
    %c2_21 = arith.constant 2 : index
    %43 = arith.index_cast %4 : i32 to index
    %c0_22 = arith.constant 0 : index
    %44 = vector.load %arg3[%c0_20, %c2_21, %43, %c0_22] : memref<1x4x2x128xf32, #tpu.memory_space<vmem>>, vector<1x1x2x128xf32>
    %45 = vector.shape_cast %44 : vector<1x1x2x128xf32> to vector<2x128xf32>
    %46 = arith.subf %45, %22 : vector<2x128xf32>
    %47 = math.exp %46 : vector<2x128xf32>
    %48 = arith.addf %39, %47 : vector<2x128xf32>
    %c2_i32_23 = arith.constant 2 : i32
    %49 = vector.broadcast %c2_i32_23 : i32 to vector<2x128xi32>
    %50 = arith.cmpi eq, %7, %49 : vector<2x128xi32>
    %51 = arith.select %50, %45, %42 : vector<2x128xi1>, vector<2x128xf32>
    %c0_24 = arith.constant 0 : index
    %c3_25 = arith.constant 3 : index
    %52 = arith.index_cast %4 : i32 to index
    %c0_26 = arith.constant 0 : index
    %53 = vector.load %arg3[%c0_24, %c3_25, %52, %c0_26] : memref<1x4x2x128xf32, #tpu.memory_space<vmem>>, vector<1x1x2x128xf32>
    %54 = vector.shape_cast %53 : vector<1x1x2x128xf32> to vector<2x128xf32>
    %55 = arith.subf %54, %22 : vector<2x128xf32>
    %56 = math.exp %55 : vector<2x128xf32>
    %57 = arith.addf %48, %56 : vector<2x128xf32>
    %c3_i32 = arith.constant 3 : i32
    %58 = vector.broadcast %c3_i32 : i32 to vector<2x128xi32>
    %59 = arith.cmpi eq, %7, %58 : vector<2x128xi32>
    %60 = arith.select %59, %54, %51 : vector<2x128xi1>, vector<2x128xf32>
    %61 = math.log %57 : vector<2x128xf32>
    %62 = arith.addf %22, %61 : vector<2x128xf32>
    %63 = arith.subf %62, %60 : vector<2x128xf32>
    %c0_27 = arith.constant 0 : index
    %c0_28 = arith.constant 0 : index
    %64 = vector.load %arg6[%c0_27, %c0_28] : memref<2x128xf32, #tpu.memory_space<vmem>>, vector<2x128xf32>
    %65 = arith.addf %64, %63 : vector<2x128xf32>
    %c0_29 = arith.constant 0 : index
    %c0_30 = arith.constant 0 : index
    %66 = vector.load %arg6[%c0_29, %c0_30] : memref<2x128xf32, #tpu.memory_space<vmem>>, vector<2x128xf32>
    tpu.vector_store %arg6[%c0_29, %c0_30], %65 {strides = array<i32>} : memref<2x128xf32, #tpu.memory_space<vmem>>, vector<2x128xf32>,
    %c1_i32_31 = arith.constant 1 : i32
    %c0_i32_32 = arith.constant 0 : i32
    %67 = arith.cmpi eq, %arg2, %c0_i32_32 : i32
    %68 = arith.extui %67 : i1 to i32
    %c0_i32_33 = arith.constant 0 : i32
    %69 = arith.cmpi ne, %68, %c0_i32_33 : i32
    scf.if %69 {
      %c0_34 = arith.constant 0 : index
      %c0_35 = arith.constant 0 : index
      %70 = vector.load %arg6[%c0_34, %c0_35] : memref<2x128xf32, #tpu.memory_space<vmem>>, vector<2x128xf32>
      %71 = vector.shape_cast %70 : vector<2x128xf32> to vector<1x2x128xf32>
      %cst_36 = arith.constant dense<0.000000e+00> : vector<1xf32>
      %72 = vector.multi_reduction <add>, %71, %cst_36 [1, 2] : vector<1x2x128xf32> to vector<1xf32>
      %73 = vector.shape_cast %72 : vector<1xf32> to vector<1x1x1xf32>
      %74 = vector.extract %73[0, 0, 0] : f32 from vector<1x1x1xf32>
      %75 = vector.broadcast %74 : f32 to vector<1x1x1xf32>
      %c0_37 = arith.constant 0 : index
      %c0_38 = arith.constant 0 : index
      %c0_39 = arith.constant 0 : index
      %76 = vector.load %arg5[%c0_37, %c0_38, %c0_39] : memref<1x1x1xf32, #tpu.memory_space<vmem>>, vector<1x1x1xf32>
      tpu.vector_store %arg5[%c0_37, %c0_38, %c0_39], %75 {strides = array<i32>} : memref<1x1x1xf32, #tpu.memory_space<vmem>>, vector<1x1x1xf32>,
    } else {
    }
    return
  }
  func.func @transform_0(%arg0: i32, %arg1: i32, %arg2: i32) -> (i32, i32, i32, i32) {
    %c1_i32 = arith.constant 1 : i32
    %0 = arith.muli %arg1, %c1_i32 : i32
    %1 = arith.addi %0, %arg2 : i32
    %c0_i32 = arith.constant 0 : i32
    %2 = arith.minsi %1, %c0_i32 : i32
    %c0_i32_0 = arith.constant 0 : i32
    %c0_i32_1 = arith.constant 0 : i32
    %c0_i32_2 = arith.constant 0 : i32
    return %arg0, %c0_i32_0, %2, %c0_i32_1 : i32, i32, i32, i32
  }
  func.func @transform_1(%arg0: i32, %arg1: i32, %arg2: i32) -> (i32, i32, i32) {
    %c1_i32 = arith.constant 1 : i32
    %0 = arith.muli %arg1, %c1_i32 : i32
    %1 = arith.addi %0, %arg2 : i32
    %c0_i32 = arith.constant 0 : i32
    %2 = arith.minsi %1, %c0_i32 : i32
    %c0_i32_0 = arith.constant 0 : i32
    %c0_i32_1 = arith.constant 0 : i32
    return %arg0, %2, %c0_i32_0 : i32, i32, i32
  }
  func.func @transform_2(%arg0: i32, %arg1: i32, %arg2: i32) -> (i32, i32, i32) {
    %c0_i32 = arith.constant 0 : i32
    %c0_i32_0 = arith.constant 0 : i32
    return %arg0, %arg1, %c0_i32 : i32, i32, i32
  }
}

</mosaic_0001>

<llo_original>
// kernel: cross_entropy_loss.1
$region0: #{cross_entropy_loss.1}
  #allocation0 [shape = 'u32[]', space=smem, size = 0x4, offset = 0x4, fixed_abs, tag = 'smem constant byte address 0x4 - core index']
  #allocation1 [shape = 'u32[144,128]{1,0:T(1,128)}', space=vmem, size = 0x12000, scoped, tag = 'internal scratch']
  #allocation2 [shape = 'f32[2,128]{1,0:T(2,128)}', space=vmem, size = 0x400, scoped, tag = 'scratch operand']
  %s0 = inlined_call_operand.vmem [shape: f32[2,4,2,128], index: 0, kind: input, shape index: {}]
  %s1 = inlined_call_operand.vmem [shape: s32[2,2,128], index: 1, kind: input, shape index: {}]
  %s2 = inlined_call_operand.vmem [shape: f32[2,1,1], index: 2, kind: output, shape index: {}]
  %s3 = sld [smem:[#allocation0]]
  $region49: #{cross_entropy_loss.1} parent=0
    _
  %s5 = ssub.s32 1, %s3
  %s6 = scalar_select 0, %s5, %s3
  loop: start=0, step=1, limit=4
  $region2: #{cross_entropy_loss.1} parent=0 // loop_pre_header
    _
  $region3: #{cross_entropy_loss.1} parent=0 // loop_header
    %s8 = sphi 0, %s12
    %p9 = scmp.ge.s32.totalorder %s8, 4
    %s15 = sphi 0, %s34
    %s16 = sphi 0, %s30
    %s17 = sphi 0, %s26
    %s18 = sphi 0, %s15
    %s19 = sphi 0, %s16
    %s20 = sphi 0, %s17
    %s21 = sphi 0, %s18
    %s22 = sphi 0, %s19
    %s23 = sphi 0, %s20
    %s45 = sphi 0, %s47
    %s48 = sphi 0, %s45
    %s49 = sphi 0, %s48
    %s65 = sphi 0, %s49
    %s79 = sphi 0, %s81
    %s82 = sphi 0, %s79
    %s83 = sphi 0, %s82
    %s99 = sphi 0, %s83
    %s107 = sphi 0, %s109
    %s110 = sphi 0, %s107
    %s111 = sphi 0, %s110
    %s127 = sphi 0, %s111
  $region4: #{cross_entropy_loss.1} parent=0 // loop_header_branch
    %11 = sbr.rel (%p9) target = $region8
  $region5: #{cross_entropy_loss.1} parent=0 // loop_body
    %s13 = ssub.s32 %s8, 1
    %s14 = ssub.s32 %s8, 2
    %s24 = sadd.s32 1, %s17
    %p25 = scmp.ge.s32.totalorder %s24, 1
    %s26 = scalar_select %p25, 0, %s24
    %s27 = sadd.s32 1, %s16
    %s28 = scalar_select %p25, %s27, %s16
    %p29 = scmp.ge.s32.totalorder %s28, 1
    %s30 = scalar_select %p29, 0, %s28
    %s31 = sadd.s32 1, %s15
    %s32 = scalar_select %p29, %s31, %s15
    %p33 = scmp.ge.s32.totalorder %s32, 2
    %s34 = scalar_select %p33, 0, %s32
    %s35 = sadd.s32 %s16, %s17
    %p36 = scmp.lt.s32.totalorder %s35, 0
    %s37 = scalar_select %p36, %s35, 0
    %s38 = sadd.s32 %s30, %s26
    %p39 = scmp.lt.s32.totalorder %s38, 0
    %s40 = scalar_select %p39, %s38, 0
    %s41 = ssub.s32 %s15, %s34
    %s42 = ssub.s32 %s37, %s40
    %s43 = sor.u32 %s41, %s42
    %p44 = scmp.eq.s32.totalorder %s43, 0
    %s46 = sadd.s32 %s45, 1
    %s47 = scalar_select %p44, %s45, %s46
    %p50 = pneg %p44
    %p51 = scmp.eq.s32.totalorder %s8, 1
    %p52 = por %p50, %p51
    %p53 = scmp.ne.s32.totalorder %s45, %s48
    %p54 = scmp.eq.s32.totalorder %s8, 0
    %p55 = por %p53, %p54
    %p56 = scmp.ne.s32.totalorder %s45, %s48
    %p57 = scmp.eq.s32.totalorder %s13, 1
    %p58 = por %p56, %p57
    %p59 = scmp.ne.s32.totalorder %s48, %s49
    %p60 = scmp.eq.s32.totalorder %s13, 0
    %p61 = por %p59, %p60
    %p62 = scmp.ne.s32.totalorder %s48, %s49
    %p63 = scmp.eq.s32.totalorder %s14, 1
    %p64 = por %p62, %p63
    %p66 = scmp.ne.s32.totalorder %s49, %s65
    %p67 = scmp.eq.s32.totalorder %s14, 0
    %p68 = por %p66, %p67
    %s69 = sadd.s32 %s16, %s17
    %p70 = scmp.lt.s32.totalorder %s69, 0
    %s71 = scalar_select %p70, %s69, 0
    %s72 = sadd.s32 %s30, %s26
    %p73 = scmp.lt.s32.totalorder %s72, 0
    %s74 = scalar_select %p73, %s72, 0
    %s75 = ssub.s32 %s15, %s34
    %s76 = ssub.s32 %s71, %s74
    %s77 = sor.u32 %s75, %s76
    %p78 = scmp.eq.s32.totalorder %s77, 0
    %s80 = sadd.s32 %s79, 1
    %s81 = scalar_select %p78, %s79, %s80
    %p84 = pneg %p78
    %p85 = scmp.eq.s32.totalorder %s8, 1
    %p86 = por %p84, %p85
    %p87 = scmp.ne.s32.totalorder %s79, %s82
    %p88 = scmp.eq.s32.totalorder %s8, 0
    %p89 = por %p87, %p88
    %p90 = scmp.ne.s32.totalorder %s79, %s82
    %p91 = scmp.eq.s32.totalorder %s13, 1
    %p92 = por %p90, %p91
    %p93 = scmp.ne.s32.totalorder %s82, %s83
    %p94 = scmp.eq.s32.totalorder %s13, 0
    %p95 = por %p93, %p94
    %p96 = scmp.ne.s32.totalorder %s82, %s83
    %p97 = scmp.eq.s32.totalorder %s14, 1
    %p98 = por %p96, %p97
    %p100 = scmp.ne.s32.totalorder %s83, %s99
    %p101 = scmp.eq.s32.totalorder %s14, 0
    %p102 = por %p100, %p101
    %s103 = ssub.s32 %s15, %s34
    %s104 = ssub.s32 %s16, %s30
    %s105 = sor.u32 %s103, %s104
    %p106 = scmp.eq.s32.totalorder %s105, 0
    %s108 = sadd.s32 %s107, 1
    %s109 = scalar_select %p106, %s107, %s108
    %p112 = pneg %p106
    %p113 = scmp.eq.s32.totalorder %s8, 1
    %p114 = por %p112, %p113
    %p115 = scmp.ne.s32.totalorder %s107, %s110
    %p116 = scmp.eq.s32.totalorder %s8, 0
    %p117 = por %p115, %p116
    %p118 = scmp.ne.s32.totalorder %s107, %s110
    %p119 = scmp.eq.s32.totalorder %s13, 1
    %p120 = por %p118, %p119
    %p121 = scmp.ne.s32.totalorder %s110, %s111
    %p122 = scmp.eq.s32.totalorder %s13, 0
    %p123 = por %p121, %p122
    %p124 = scmp.ne.s32.totalorder %s110, %s111
    %p125 = scmp.eq.s32.totalorder %s14, 1
    %p126 = por %p124, %p125
    %p128 = scmp.ne.s32.totalorder %s111, %s127
    %p129 = scmp.eq.s32.totalorder %s14, 0
    %p130 = por %p128, %p129
    %p131 = scmp.le.s32.totalorder 1, %s8
    %p132 = scmp.lt.s32.totalorder %s8, 3
    %p133 = pnand %p131, %p132
    %p134 = pneg %p133
    // Predicated region
    $region9: #{cross_entropy_loss.1} parent=5 // pred_check
      _
    $region10: #{cross_entropy_loss.1} parent=5 // pred_check_branch
      %136 = sbr.rel (%p133) target = $region12
    $region11: #{cross_entropy_loss.1} parent=5 // pred_region
      %s137 = ssub.s32 %s8, 1
    $region12: #{cross_entropy_loss.1} parent=5 // pred_fallthru
      _
    %p138 = scmp.lt.s32.totalorder %s8, 2
    // Predicated region
    $region13: #{cross_entropy_loss.1} parent=5 // pred_check
      %p139 = pneg %p138
    $region14: #{cross_entropy_loss.1} parent=5 // pred_check_branch
      %141 = sbr.rel (%p139) target = $region16
    $region15: #{cross_entropy_loss.1} parent=5 // pred_region
      // Predicated region
      $region17: #{cross_entropy_loss.1} parent=15 // pred_check
        %p142 = pneg %p55
      $region18: #{cross_entropy_loss.1} parent=15 // pred_check_branch
        %144 = sbr.rel (%p142) target = $region20
      $region19: #{cross_entropy_loss.1} parent=15 // pred_region
        %s145 = sadd.s32 %s16, %s17
        %p146 = scmp.lt.s32.totalorder %s145, 0
        %s147 = scalar_select %p146, %s145, 0
        %p148 = scmp.lt.s32.totalorder %s15, 1
        %s149 = scalar_select %p148, %s15, 1
        %p150 = scmp.lt.s32.totalorder %s147, 0
        %s151 = scalar_select %p150, %s147, 0
        %s152 = smul.addr %s149, 4
        %s153 = sadd.s32 %s151, %s152
        %s154 = smul.addr %s153, 2
        %s155 = scalar_lea.vmem %s0, %s154
        %s156 = sadd.s32 %s16, %s17
        %p157 = scmp.lt.s32.totalorder %s156, 0
        %s158 = scalar_select %p157, %s156, 0
      $region20: #{cross_entropy_loss.1} parent=15 // pred_fallthru
        _
      // Predicated region
      $region21: #{cross_entropy_loss.1} parent=15 // pred_check
        %p159 = pneg %p89
      $region22: #{cross_entropy_loss.1} parent=15 // pred_check_branch
        %161 = sbr.rel (%p159) target = $region24
      $region23: #{cross_entropy_loss.1} parent=15 // pred_region
        %s162 = sadd.s32 %s16, %s17
        %p163 = scmp.lt.s32.totalorder %s162, 0
        %s164 = scalar_select %p163, %s162, 0
        %p165 = scmp.lt.s32.totalorder %s15, 1
        %s166 = scalar_select %p165, %s15, 1
        %p167 = scmp.lt.s32.totalorder %s164, 0
        %s168 = scalar_select %p167, %s164, 0
        %s169 = sadd.s32 %s168, %s166
        %s170 = smul.addr %s169, 2
        %s171 = scalar_lea.vmem %s1, %s170
        %s172 = sadd.s32 %s16, %s17
        %p173 = scmp.lt.s32.totalorder %s172, 0
        %s174 = scalar_select %p173, %s172, 0
      $region24: #{cross_entropy_loss.1} parent=15 // pred_fallthru
        _
    $region16: #{cross_entropy_loss.1} parent=5 // pred_fallthru
      _
    %p175 = scmp.le.s32.totalorder 1, %s8
    %p176 = scmp.lt.s32.totalorder %s8, 3
    %p177 = pnand %p175, %p176
    %p178 = pneg %p177
    // Predicated region
    $region25: #{cross_entropy_loss.1} parent=5 // pred_check
      _
    $region26: #{cross_entropy_loss.1} parent=5 // pred_check_branch
      %180 = sbr.rel (%p177) target = $region28
    $region27: #{cross_entropy_loss.1} parent=5 // pred_region
      %s181 = ssub.s32 %s8, 1
      %s182 = sadd.s32 %s19, %s20
      %p183 = scmp.lt.s32.totalorder %s182, 0
      %s184 = scalar_select %p183, %s182, 0
      %p185 = scmp.lt.s32.totalorder %s18, 1
      %s186 = scalar_select %p185, %s18, 1
      %p187 = scmp.lt.s32.totalorder %s184, 0
      %s188 = scalar_select %p187, %s184, 0
      %s189 = smul.addr %s186, 4
      %s190 = sadd.s32 %s188, %s189
      %s191 = smul.addr %s190, 2
      %s192 = scalar_lea.vmem %s0, %s191
      %p193 = pneg %p61
      %p194 = pneg %p58
      %s195 = sadd.s32 %s19, %s20
      %p196 = scmp.lt.s32.totalorder %s195, 0
      %s197 = scalar_select %p196, %s195, 0
      %p198 = scmp.lt.s32.totalorder %s18, 1
      %s199 = scalar_select %p198, %s18, 1
      %p200 = scmp.lt.s32.totalorder %s197, 0
      %s201 = scalar_select %p200, %s197, 0
      %s202 = sadd.s32 %s201, %s199
      %s203 = smul.addr %s202, 2
      %s204 = scalar_lea.vmem %s1, %s203
      %p205 = pneg %p95
      %p206 = pneg %p92
      %p207 = pneg %p123
      %p208 = pneg %p120
      %p209 = scmp.lt.s32.totalorder %s18, 1
      %s210 = scalar_select %p209, %s18, 1
      %p211 = scmp.lt.s32.totalorder %s19, 0
      %s212 = scalar_select %p211, %s19, 0
      %s213 = sadd.s32 %s212, %s210
      %s214 = scalar_lea.vmem %s2, %s213
      %s215 = sadd.s32 %s19, %s20
      %p216 = scmp.lt.s32.totalorder %s215, 0
      %s217 = scalar_select %p216, %s215, 0
      %p218 = scmp.lt.s32.totalorder %s18, 1
      %s219 = scalar_select %p218, %s18, 1
      %p220 = scmp.lt.s32.totalorder %s217, 0
      %s221 = scalar_select %p220, %s217, 0
      %s222 = smul.addr %s219, 4
      %s223 = sadd.s32 %s221, %s222
      %s224 = smul.addr %s223, 2
      %s225 = scalar_lea.vmem %s0, %s224
      %s226 = sadd.s32 %s19, %s20
      %p227 = scmp.lt.s32.totalorder %s226, 0
      %s228 = scalar_select %p227, %s226, 0
      %s229 = sadd.s32 %s19, %s20
      %p230 = scmp.lt.s32.totalorder %s229, 0
      %s231 = scalar_select %p230, %s229, 0
      %p232 = scmp.lt.s32.totalorder %s18, 1
      %s233 = scalar_select %p232, %s18, 1
      %p234 = scmp.lt.s32.totalorder %s231, 0
      %s235 = scalar_select %p234, %s231, 0
      %s236 = sadd.s32 %s235, %s233
      %s237 = smul.addr %s236, 2
      %s238 = scalar_lea.vmem %s1, %s237
      %s239 = sadd.s32 %s19, %s20
      %p240 = scmp.lt.s32.totalorder %s239, 0
      %s241 = scalar_select %p240, %s239, 0
      %p242 = scmp.lt.s32.totalorder %s18, 1
      %s243 = scalar_select %p242, %s18, 1
      %p244 = scmp.lt.s32.totalorder %s19, 0
      %s245 = scalar_select %p244, %s19, 0
      %s246 = sadd.s32 %s245, %s243
      %s247 = scalar_lea.vmem %s2, %s246
      %p248 = scmp.eq.s32.totalorder %s20, 0
      // Predicated region
      $region29: #{cross_entropy_loss.1} parent=27 // pred_check
        %p249 = pneg %p248
      $region30: #{cross_entropy_loss.1} parent=27 // pred_check_branch
        %251 = sbr.rel (%p249) target = $region32
      $region31: #{cross_entropy_loss.1} parent=27 // pred_region
        %252 = vst [vmem:[#allocation2] sm:$0x3] 0.0
      $region32: #{cross_entropy_loss.1} parent=27 // pred_fallthru
        _
      %v253 = vld [vmem:[%s238] sm:$0x3]
      %v254 = vld [vmem:[%s225] sm:$0x3]
      %s255 = sadd.s32 0, 2
      %s256 = scalar_lea.vmem %s225, %s255
      %v257 = vld [vmem:[%s256] sm:$0x3]
      %v258 = vmax.f32 %v254, %v257
      %s259 = sadd.s32 0, 4
      %s260 = scalar_lea.vmem %s225, %s259
      %v261 = vld [vmem:[%s260] sm:$0x3]
      %v262 = vmax.f32 %v258, %v261
      %s263 = sadd.s32 0, 6
      %s264 = scalar_lea.vmem %s225, %s263
      %v265 = vld [vmem:[%s264] sm:$0x3]
      %v266 = vmax.f32 %v262, %v265
      %v267 = vsub.f32 %v254, %v266
      %v268 = vmul.f32 %v267, 1.442695
      %v269 = vpow.pop %v268
      %v270 = vadd.f32 %v269, 0.0
      %vm271 = vcmp.eq.s32.totalorder %v253, 0
      %v272 = vsel %vm271, %v254, 0.0
      %v273 = vsub.f32 %v257, %v266
      %v274 = vmul.f32 %v273, 1.442695
      %v275 = vpow.pop %v274
      %v276 = vadd.f32 %v270, %v275
      %vm277 = vcmp.eq.s32.totalorder %v253, 1
      %v278 = vsel %vm277, %v257, %v272
      %v279 = vsub.f32 %v261, %v266
      %v280 = vmul.f32 %v279, 1.442695
      %v281 = vpow.pop %v280
      %v282 = vadd.f32 %v276, %v281
      %vm283 = vcmp.eq.s32.totalorder %v253, 2
      %v284 = vsel %vm283, %v261, %v278
      %v285 = vsub.f32 %v265, %v266
      %v286 = vmul.f32 %v285, 1.442695
      %v287 = vpow.pop %v286
      %v288 = vadd.f32 %v282, %v287
      %vm289 = vcmp.eq.s32.totalorder %v253, 3
      %v290 = vsel %vm289, %v265, %v284
      %v291 = vlog2.pop %v288
      %v292 = vmul.f32 %v291, 0.6931472
      %v293 = vadd.f32 %v266, %v292
      %v294 = vsub.f32 %v293, %v290
      %v295 = vld [vmem:[#allocation2] sm:$0x3]
      %v296 = vadd.f32 %v295, %v294
      %297 = vst [vmem:[#allocation2] sm:$0x3] %v296
      // Predicated region
      $region33: #{cross_entropy_loss.1} parent=27 // pred_check
        %p298 = pneg %p248
      $region34: #{cross_entropy_loss.1} parent=27 // pred_check_branch
        %300 = sbr.rel (%p298) target = $region36
      $region35: #{cross_entropy_loss.1} parent=27 // pred_region
        %v301 = vld [vmem:[#allocation2] sm:$0x3]
        %vm302 = vcmask 1041408
        %v303 = vsel %vm302, %v301, 0.0
        %304 = vadd.xlane.f32.xlu0 %v303
        %v305 = vpop.xlane.xlu0 %304
        %v306 = vrot.slane %v305, 4
        %v307 = vadd.f32 %v305, %v306
        %v308 = vrot.slane %v307, 2
        %v309 = vadd.f32 %v307, %v308
        %v310 = vrot.slane %v309, 1
        %v311 = vadd.f32 %v309, %v310
        %s312 = vtos %v311
        %v313 = vstv %s312
        %vm314 = vcmask 0
        %315 = vst.msk [vmem:[%s247] sm:$0x1] %vm314, %v313
      $region36: #{cross_entropy_loss.1} parent=27 // pred_fallthru
        _
      %p316 = scmp.lt.s32.totalorder %s18, 1
      %s317 = scalar_select %p316, %s18, 1
      %p318 = scmp.lt.s32.totalorder %s19, 0
      %s319 = scalar_select %p318, %s19, 0
      %s320 = sadd.s32 %s319, %s317
      %s321 = scalar_lea.vmem %s2, %s320
      // Predicated region
      $region37: #{cross_entropy_loss.1} parent=27 // pred_check
        %p322 = pneg %p120
      $region38: #{cross_entropy_loss.1} parent=27 // pred_check_branch
        %324 = sbr.rel (%p322) target = $region40
      $region39: #{cross_entropy_loss.1} parent=27 // pred_region
        _
      $region40: #{cross_entropy_loss.1} parent=27 // pred_fallthru
        _
    $region28: #{cross_entropy_loss.1} parent=5 // pred_fallthru
      _
    %p325 = scmp.le.s32.totalorder 2, %s8
    // Predicated region
    $region41: #{cross_entropy_loss.1} parent=5 // pred_check
      %p326 = pneg %p325
    $region42: #{cross_entropy_loss.1} parent=5 // pred_check_branch
      %328 = sbr.rel (%p326) target = $region44
    $region43: #{cross_entropy_loss.1} parent=5 // pred_region
      %s329 = ssub.s32 %s8, 2
      // Predicated region
      $region45: #{cross_entropy_loss.1} parent=43 // pred_check
        %p330 = pneg %p126
      $region46: #{cross_entropy_loss.1} parent=43 // pred_check_branch
        %332 = sbr.rel (%p330) target = $region48
      $region47: #{cross_entropy_loss.1} parent=43 // pred_region
        %p333 = scmp.lt.s32.totalorder %s21, 1
        %s334 = scalar_select %p333, %s21, 1
        %p335 = scmp.lt.s32.totalorder %s22, 0
        %s336 = scalar_select %p335, %s22, 0
        %s337 = sadd.s32 %s336, %s334
        %s338 = scalar_lea.vmem %s2, %s337
      $region48: #{cross_entropy_loss.1} parent=43 // pred_fallthru
        _
    $region44: #{cross_entropy_loss.1} parent=5 // pred_fallthru
      _
  $region6: #{cross_entropy_loss.1} parent=0 // loop_footer
    %s12 = sadd.s32 1, %s8
  $region7: #{cross_entropy_loss.1} parent=0 // loop_footer_branch
    %7 = sbr.rel target = $region3
  $region8: #{cross_entropy_loss.1} parent=0 // loop_exit
    _

</llo_original>
